<compile_context>
chip_gen: v5e
topology: v5e:2x2
jax: 0.10.0
libtpu: 0.0.40
codegen_flags: <defaults>
</compile_context>

<pallas_src>
import functools

import jax
import jax.numpy as jnp
from jax.experimental import pallas as pl
from jax.experimental.pallas import tpu as pltpu


def _round_up(x, m):
    return (x + m - 1) // m * m


def _has_two_tensorcores():
    """True on v7x-class chips (2 TensorCores); used only for tile heuristics."""
    try:
        kind = jax.devices()[0].device_kind.lower()
    except Exception:
        return False
    return "v7" in kind


def _circle_loss_kernel(feat_ref, w_ref, lbl_ref,
                        ypred_ref, sp_ref, loss_ref,
                        m_sc, l_sc, sp_sc,
                        *, margin, gamma, num_classes, class_padded):
    """Grid = (batch_tiles, class_tiles); class axis is the (last) reduction axis."""
    j = pl.program_id(1)
    nj = pl.num_programs(1)
    block_c = w_ref.shape[1]

    @pl.when(j == 0)
    def _init():
        m_sc[...] = jnp.full(m_sc.shape, -jnp.inf, dtype=m_sc.dtype)
        l_sc[...] = jnp.zeros_like(l_sc)
        sp_sc[...] = jnp.zeros_like(sp_sc)

    # Operands are already L2-normalized (scaling folded into the bf16 cast in
    # the wrapper); MXU matmul with f32 accumulation.
    y = jnp.dot(feat_ref[...], w_ref[...], preferred_element_type=jnp.float32)
    y = jnp.clip(y, -1.0, 1.0)                       # y_pred.clamp(-1, 1)
    ypred_ref[...] = y.astype(ypred_ref.dtype)       # bf16 writeback; f32 stays live

    # Positive mask from the label vector (no one-hot HBM traffic).  Fixed
    # in-tile iota compared against (label - j*block_c): the tile offset is a
    # cheap (TB,1) column op instead of a full-tile add.
    col = jax.lax.broadcasted_iota(jnp.int32, y.shape, 1)
    lbl_local = lbl_ref[...] - j * block_c           # (TB, 1)
    pos = col == lbl_local                           # (TB, TC) bool

    # sp = target-class cosine (at most one hit per row across all class tiles).
    sp_sc[...] += jnp.sum(jnp.where(pos, y, 0.0), axis=1, keepdims=True)

    # Negative-class circle logits only; the positive logit is folded in
    # analytically from sp on the last class tile.
    #   alpha_n = max(y - O_n, 0) = max(y + margin, 0);  Delta_n = margin
    logit_n = (gamma * jnp.maximum(y + margin, 0.0)) * (y - margin)
    neg_mask = jnp.logical_not(pos)
    if class_padded:
        # Only the last class tile actually contains padded columns; the compare
        # is trivially all-true elsewhere but still cheap relative to the exp.
        neg_mask = jnp.logical_and(neg_mask, col < (num_classes - j * block_c))
    logits = jnp.where(neg_mask, logit_n, -jnp.inf)

    # Online logsumexp across class tiles.
    m_prev = m_sc[...]
    m_new = jnp.maximum(m_prev, jnp.max(logits, axis=1, keepdims=True))
    m_new = jnp.maximum(m_new, jnp.float32(-1e30))   # guard fully-masked rows
    l_sc[...] = (l_sc[...] * jnp.exp(m_prev - m_new)
                 + jnp.sum(jnp.exp(logits - m_new), axis=1, keepdims=True))
    m_sc[...] = m_new

    @pl.when(j == nj - 1)
    def _finalize():
        sp = sp_sc[...]
        # Positive-class circle logit derived from sp:
        #   gamma * max(O_p - sp, 0) * (sp - Delta_p)
        target = (gamma * jnp.maximum((1.0 + margin) - sp, 0.0)) * (sp - (1.0 - margin))
        m_fin = jnp.maximum(m_sc[...], target)
        l_fin = l_sc[...] * jnp.exp(m_sc[...] - m_fin) + jnp.exp(target - m_fin)
        loss_ref[...] = (m_fin + jnp.log(l_fin)) - target   # per-row cross entropy
        sp_ref[...] = sp


def gather_sn(y_pred, label):
    """sn = y_pred[mask == 0] flattened row-major (PyTorch boolean-mask order)."""
    num_classes = y_pred.shape[1]
    neg_idx = jnp.arange(num_classes - 1)[None, :]
    neg_idx = neg_idx + (neg_idx >= label[:, None]).astype(neg_idx.dtype)
    return jnp.take_along_axis(y_pred, neg_idx, axis=1).reshape(-1)


@functools.partial(jax.jit, static_argnames=("margin", "gamma", "block_b",
                                             "block_c", "materialize_sn"))
def label_circle_loss_forward(feat, weight, label, *, margin=0.35, gamma=30.0,
                              block_b=None, block_c=None, materialize_sn=True):
    """Matches LabelCircleLossModel._forward_train.

    Returns (loss, sp, sn) when materialize_sn=True (parity with the module),
    or (loss, sp, y_pred) when materialize_sn=False (skips the HBM-doubling
    negative-class gather; the consumer can mask y_pred itself).
    """
    bs, feat_dim = feat.shape
    feat_dim_w, num_classes = weight.shape
    assert feat_dim == feat_dim_w
    eps = 1e-12   # torch.nn.functional.normalize default eps

    # Tile sizes: batch tiles multiple of 16 (bf16 sublane pack), class tiles
    # multiple of 128 (lane width).  Large defaults amortize per-grid-step
    # overhead and weight re-streaming; the double-buffered working set at
    # 512 x 2048 bf16 is only a few MiB, far under the 48 MiB VMEM budget.
    if block_c is None:
        block_c = min(2048, _round_up(num_classes, 128))
    if block_b is None:
        block_b = min(512, _round_up(bs, 16))
        if _has_two_tensorcores() and bs > 16:
            # Keep >= 2 batch tiles so the "parallel" axis spans both TCs (v7x).
            block_b = min(block_b, _round_up(pl.cdiv(bs, 2), 16))
    bs_pad = _round_up(bs, block_b)
    c_pad = _round_up(num_classes, block_c)
    pad_b = bs_pad - bs
    pad_c = c_pad - num_classes

    feat32 = feat.astype(jnp.float32)
    w32 = weight.astype(jnp.float32)

    # F.normalize folded directly into the operand bf16 casts (one fused pass),
    # so the kernel consumes pre-normalized tiles and does no rescaling.
    inv_fn = 1.0 / jnp.maximum(
        jnp.sqrt(jnp.sum(feat32 * feat32, axis=1, keepdims=True)), eps)
    inv_wn = 1.0 / jnp.maximum(
        jnp.sqrt(jnp.sum(w32 * w32, axis=0, keepdims=True)), eps)
    feat_p = jnp.pad((feat32 * inv_fn).astype(jnp.bfloat16), ((0, pad_b), (0, 0)))
    w_p = jnp.pad((w32 * inv_wn).astype(jnp.bfloat16), ((0, 0), (0, pad_c)))
    lbl_p = jnp.pad(label.astype(jnp.int32), (0, pad_b)).reshape(bs_pad, 1)

    grid = (bs_pad // block_b, c_pad // block_c)
    n_batch_tiles = grid[0]

    kernel = functools.partial(
        _circle_loss_kernel, margin=float(margin), gamma=float(gamma),
        num_classes=int(num_classes), class_padded=bool(pad_c))

    # Feat tile index is constant across the class axis (fetched once per batch
    # tile); the full weight matrix is re-streamed once per batch tile; y_pred
    # is written back in bf16.
    cost = pl.CostEstimate(
        flops=2 * bs_pad * feat_dim * c_pad + 10 * bs_pad * c_pad,
        transcendentals=bs_pad * c_pad,
        bytes_accessed=(bs_pad * feat_dim * 2                       # feat read
                        + n_batch_tiles * feat_dim * c_pad * 2      # weight re-reads
                        + bs_pad * c_pad * 2                        # y_pred (bf16) write
                        + bs_pad * 4                                # labels
                        + 2 * bs_pad * 4))                          # sp + loss

    y_pred_pad, sp_pad, loss_pad = pl.pallas_call(
        kernel,
        out_shape=(
            jax.ShapeDtypeStruct((bs_pad, c_pad), jnp.bfloat16),   # y_pred (bf16)
            jax.ShapeDtypeStruct((bs_pad, 1), jnp.float32),        # sp per row
            jax.ShapeDtypeStruct((bs_pad, 1), jnp.float32),        # CE per row
        ),
        grid_spec=pltpu.PrefetchScalarGridSpec(
            num_scalar_prefetch=0,
            grid=grid,
            in_specs=[
                pl.BlockSpec((block_b, feat_dim), lambda i, j: (i, 0)),   # feat (pre-scaled)
                pl.BlockSpec((feat_dim, block_c), lambda i, j: (0, j)),   # weight (pre-scaled)
                pl.BlockSpec((block_b, 1), lambda i, j: (i, 0)),          # labels
            ],
            out_specs=(
                pl.BlockSpec((block_b, block_c), lambda i, j: (i, j)),    # y_pred
                pl.BlockSpec((block_b, 1), lambda i, j: (i, 0)),          # sp
                pl.BlockSpec((block_b, 1), lambda i, j: (i, 0)),          # loss
            ),
            scratch_shapes=[
                pltpu.VMEM((block_b, 1), jnp.float32),   # running max
                pltpu.VMEM((block_b, 1), jnp.float32),   # running sum-exp
                pltpu.VMEM((block_b, 1), jnp.float32),   # sp accumulator
            ]),
        compiler_params=pltpu.CompilerParams(
            dimension_semantics=("parallel", "arbitrary"),
            vmem_limit_bytes=48 * 1024 * 1024),
        cost_estimate=cost,
    )(feat_p, w_p, lbl_p)

    y_pred = y_pred_pad[:bs, :num_classes]
    sp = sp_pad[:bs, 0]
    loss = jnp.mean(loss_pad[:bs, 0])       # nn.CrossEntropyLoss reduction='mean'

    if materialize_sn:
        # TODO(synk): consumers that can mask y_pred themselves should pass
        # materialize_sn=False and skip this HBM-doubling gather.
        sn = gather_sn(y_pred, label)
        return loss, sp, sn
    return loss, sp, y_pred


def _mirror_reference(feat, weight, label, margin, gamma):
    """Pure-JAX reference with the same pre-normalized bf16 matmul precision."""
    eps = 1e-12
    f32 = feat.astype(jnp.float32)
    w32 = weight.astype(jnp.float32)
    inv_fn = 1.0 / jnp.maximum(jnp.sqrt(jnp.sum(f32 * f32, axis=1, keepdims=True)), eps)
    inv_wn = 1.0 / jnp.maximum(jnp.sqrt(jnp.sum(w32 * w32, axis=0, keepdims=True)), eps)
    y = jnp.dot((f32 * inv_fn).astype(jnp.bfloat16), (w32 * inv_wn).astype(jnp.bfloat16),
                preferred_element_type=jnp.float32)
    y = jnp.clip(y, -1.0, 1.0)
    num_classes = weight.shape[1]
    y_true = jax.nn.one_hot(label, num_classes, dtype=jnp.float32)
    alpha_p = jnp.maximum((1.0 + margin) - y, 0.0)
    alpha_n = jnp.maximum(y + margin, 0.0)
    logits = (y_true * (alpha_p * (y - (1.0 - margin)))
              + (1.0 - y_true) * (alpha_n * (y - margin))) * gamma
    per_row = jax.nn.logsumexp(logits, axis=1) - jnp.sum(y_true * logits, axis=1)
    loss = jnp.mean(per_row)
    sp = jnp.sum(y_true * y, axis=1)
    sn = gather_sn(y, label)
    return loss, sp, sn


if __name__ == "__main__":
    # Small deterministic example: feature_dim matches the module default (192),
    # num_classes not a multiple of 128 and bs not a multiple of the batch tile
    # so padding/masking paths and multi-tile grids are exercised.
    num_classes = 300
    feature_dim = 192
    bs = 40
    margin, gamma = 0.35, 30.0

    key = jax.random.PRNGKey(0)
    k_feat, k_w, k_lbl = jax.random.split(key, 3)
    feat = jax.random.normal(k_feat, (bs, feature_dim), dtype=jnp.float32)
    # weight ~ standard normal (init_weights re-draws it with .normal_())
    weight = jax.random.normal(k_w, (feature_dim, num_classes), dtype=jnp.float32)
    label = jax.random.randint(k_lbl, (bs,), 0, num_classes, dtype=jnp.int32)

    loss_r, sp_r, sn_r = _mirror_reference(feat, weight, label, margin, gamma)

    # 1) Small explicit tiles -> (3, 3) grid: exercises multi-tile online
    #    logsumexp, batch padding and class padding.
    loss, sp, sn = label_circle_loss_forward(
        feat, weight, label, margin=margin, gamma=gamma, block_b=16, block_c=128)
    jax.block_until_ready((loss, sp, sn))
    assert loss.shape == () and sp.shape == (bs,)
    assert sn.shape == (bs * (num_classes - 1),)
    assert bool(jnp.isfinite(loss))
    assert bool(jnp.allclose(loss, loss_r, rtol=2e-2, atol=2e-2)), (loss, loss_r)
    assert bool(jnp.allclose(sp, sp_r, rtol=2e-2, atol=2e-2))
    assert bool(jnp.allclose(sn.astype(jnp.float32), sn_r, rtol=2e-2, atol=2e-2))

    # 2) Default tile selection (single class tile path) + sn-free fast path.
    loss_d, sp_d, y_pred_d = label_circle_loss_forward(
        feat, weight, label, margin=margin, gamma=gamma, materialize_sn=False)
    jax.block_until_ready((loss_d, sp_d, y_pred_d))
    assert y_pred_d.shape == (bs, num_classes)
    assert bool(jnp.allclose(loss_d, loss_r, rtol=2e-2, atol=2e-2)), (loss_d, loss_r)
    assert bool(jnp.allclose(sp_d, sp_r, rtol=2e-2, atol=2e-2))

    print("KERNEL_OK")
</pallas_src>

<mosaic_0001>
module attributes {stable_mosaic.version = 11 : i64} {
  func.func @_circle_loss_kernel(%arg0: i32, %arg1: i32, %arg2: memref<16x192xbf16, #tpu.memory_space<vmem>>, %arg3: memref<192x128xbf16, #tpu.memory_space<vmem>>, %arg4: memref<16x1xi32, #tpu.memory_space<vmem>>, %arg5: memref<16x128xbf16, #tpu.memory_space<vmem>>, %arg6: memref<16x1xf32, #tpu.memory_space<vmem>>, %arg7: memref<16x1xf32, #tpu.memory_space<vmem>>, %arg8: memref<16x1xf32, #tpu.memory_space<vmem>>, %arg9: memref<16x1xf32, #tpu.memory_space<vmem>>, %arg10: memref<16x1xf32, #tpu.memory_space<vmem>>) attributes {dimension_semantics = [#tpu.dimension_semantics<parallel>, #tpu.dimension_semantics<arbitrary>], iteration_bounds = array<i64: 3, 3>, scalar_prefetch = 0 : i64, scratch_operands = 3 : i64, tpu.core_type = #tpu.core_type<tc>, window_params = [{transform_indices = @transform_0, window_bounds = array<i64: 16, 192>}, {transform_indices = @transform_1, window_bounds = array<i64: 192, 128>}, {transform_indices = @transform_2, window_bounds = array<i64: 16, 1>}, {transform_indices = @transform_3, window_bounds = array<i64: 16, 128>}, {transform_indices = @transform_4, window_bounds = array<i64: 16, 1>}, {transform_indices = @transform_5, window_bounds = array<i64: 16, 1>}]} {
    %c0_i32 = arith.constant 0 : i32
    %0 = arith.cmpi eq, %arg1, %c0_i32 : i32
    %1 = arith.extui %0 : i1 to i32
    %c0_i32_0 = arith.constant 0 : i32
    %2 = arith.cmpi ne, %1, %c0_i32_0 : i32
    scf.if %2 {
      %cst_35 = arith.constant 0xFF800000 : f32
      %64 = vector.broadcast %cst_35 : f32 to vector<16x1xf32>
      %c0_36 = arith.constant 0 : index
      %c0_37 = arith.constant 0 : index
      %65 = vector.load %arg8[%c0_36, %c0_37] : memref<16x1xf32, #tpu.memory_space<vmem>>, vector<16x1xf32>
      tpu.vector_store %arg8[%c0_36, %c0_37], %64 {strides = array<i32>} : memref<16x1xf32, #tpu.memory_space<vmem>>, vector<16x1xf32>,
      %cst_38 = arith.constant 0.000000e+00 : f32
      %66 = vector.broadcast %cst_38 : f32 to vector<16x1xf32>
      %c0_39 = arith.constant 0 : index
      %c0_40 = arith.constant 0 : index
      %67 = vector.load %arg9[%c0_39, %c0_40] : memref<16x1xf32, #tpu.memory_space<vmem>>, vector<16x1xf32>
      tpu.vector_store %arg9[%c0_39, %c0_40], %66 {strides = array<i32>} : memref<16x1xf32, #tpu.memory_space<vmem>>, vector<16x1xf32>,
      %cst_41 = arith.constant 0.000000e+00 : f32
      %68 = vector.broadcast %cst_41 : f32 to vector<16x1xf32>
      %c0_42 = arith.constant 0 : index
      %c0_43 = arith.constant 0 : index
      %69 = vector.load %arg10[%c0_42, %c0_43] : memref<16x1xf32, #tpu.memory_space<vmem>>, vector<16x1xf32>
      tpu.vector_store %arg10[%c0_42, %c0_43], %68 {strides = array<i32>} : memref<16x1xf32, #tpu.memory_space<vmem>>, vector<16x1xf32>,
    } else {
    }
    %c0 = arith.constant 0 : index
    %c0_1 = arith.constant 0 : index
    %3 = vector.load %arg2[%c0, %c0_1] : memref<16x192xbf16, #tpu.memory_space<vmem>>, vector<16x192xbf16>
    %c0_2 = arith.constant 0 : index
    %c0_3 = arith.constant 0 : index
    %4 = vector.load %arg3[%c0_2, %c0_3] : memref<192x128xbf16, #tpu.memory_space<vmem>>, vector<192x128xbf16>
    %cst = arith.constant dense<0.000000e+00> : vector<16x128xf32>
    %5 = tpu.matmul %3, %4, %cst {dimension_numbers = #tpu.dot_dimension_numbers<[1], [0], [0], [1], [0, 0, 1, 1], [], []>} : vector<16x192xbf16>, vector<192x128xbf16>, vector<16x128xf32> -> vector<16x128xf32>
    %cst_4 = arith.constant -1.000000e+00 : f32
    %cst_5 = arith.constant 1.000000e+00 : f32
    %6 = vector.broadcast %cst_4 : f32 to vector<16x128xf32>
    %7 = arith.maximumf %6, %5 : vector<16x128xf32>
    %8 = vector.broadcast %cst_5 : f32 to vector<16x128xf32>
    %9 = arith.minimumf %8, %7 : vector<16x128xf32>
    %10 = arith.truncf %9 : vector<16x128xf32> to vector<16x128xbf16>
    %c0_6 = arith.constant 0 : index
    %c0_7 = arith.constant 0 : index
    %11 = vector.load %arg5[%c0_6, %c0_7] : memref<16x128xbf16, #tpu.memory_space<vmem>>, vector<16x128xbf16>
    tpu.vector_store %arg5[%c0_6, %c0_7], %10 {strides = array<i32>} : memref<16x128xbf16, #tpu.memory_space<vmem>>, vector<16x128xbf16>,
    %12 = tpu.iota {dimensions = array<i32: 1>} : vector<16x128xi32>
    %c0_8 = arith.constant 0 : index
    %c0_9 = arith.constant 0 : index
    %13 = vector.load %arg4[%c0_8, %c0_9] : memref<16x1xi32, #tpu.memory_space<vmem>>, vector<16x1xi32>
    %c128_i32 = arith.constant 128 : i32
    %14 = arith.muli %arg1, %c128_i32 : i32
    %15 = vector.broadcast %14 : i32 to vector<16x1xi32>
    %16 = arith.subi %13, %15 : vector<16x1xi32>
    %17 = vector.broadcast %16 : vector<16x1xi32> to vector<16x128xi32>
    %18 = arith.cmpi eq, %12, %17 : vector<16x128xi32>
    %c0_10 = arith.constant 0 : index
    %c0_11 = arith.constant 0 : index
    %19 = vector.load %arg10[%c0_10, %c0_11] : memref<16x1xf32, #tpu.memory_space<vmem>>, vector<16x1xf32>
    %cst_12 = arith.constant 0.000000e+00 : f32
    %20 = vector.broadcast %cst_12 : f32 to vector<16x128xf32>
    %21 = arith.select %18, %9, %20 : vector<16x128xi1>, vector<16x128xf32>
    %cst_13 = arith.constant dense<0.000000e+00> : vector<16xf32>
    %22 = vector.multi_reduction <add>, %21, %cst_13 [1] : vector<16x128xf32> to vector<16xf32>
    %23 = vector.shape_cast %22 : vector<16xf32> to vector<16x1xf32>
    %24 = arith.addf %19, %23 : vector<16x1xf32>
    %c0_14 = arith.constant 0 : index
    %c0_15 = arith.constant 0 : index
    %25 = vector.load %arg10[%c0_14, %c0_15] : memref<16x1xf32, #tpu.memory_space<vmem>>, vector<16x1xf32>
    tpu.vector_store %arg10[%c0_14, %c0_15], %24 {strides = array<i32>} : memref<16x1xf32, #tpu.memory_space<vmem>>, vector<16x1xf32>,
    %cst_16 = arith.constant 3.500000e-01 : f32
    %26 = vector.broadcast %cst_16 : f32 to vector<16x128xf32>
    %27 = arith.addf %9, %26 : vector<16x128xf32>
    %cst_17 = arith.constant 0.000000e+00 : f32
    %28 = vector.broadcast %cst_17 : f32 to vector<16x128xf32>
    %29 = arith.maximumf %27, %28 : vector<16x128xf32>
    %cst_18 = arith.constant 3.000000e+01 : f32
    %30 = vector.broadcast %cst_18 : f32 to vector<16x128xf32>
    %31 = arith.mulf %30, %29 : vector<16x128xf32>
    %cst_19 = arith.constant 3.500000e-01 : f32
    %32 = vector.broadcast %cst_19 : f32 to vector<16x128xf32>
    %33 = arith.subf %9, %32 : vector<16x128xf32>
    %34 = arith.mulf %31, %33 : vector<16x128xf32>
    %cst_20 = arith.constant dense<true> : vector<16x128xi1>
    %35 = arith.xori %18, %cst_20 : vector<16x128xi1>
    %c128_i32_21 = arith.constant 128 : i32
    %36 = arith.muli %arg1, %c128_i32_21 : i32
    %c300_i32 = arith.constant 300 : i32
    %37 = arith.subi %c300_i32, %36 : i32
    %38 = vector.broadcast %37 : i32 to vector<16x128xi32>
    %39 = arith.cmpi slt, %12, %38 : vector<16x128xi32>
    %40 = arith.andi %35, %39 : vector<16x128xi1>
    %cst_22 = arith.constant 0xFF800000 : f32
    %41 = vector.broadcast %cst_22 : f32 to vector<16x128xf32>
    %42 = arith.select %40, %34, %41 : vector<16x128xi1>, vector<16x128xf32>
    %c0_23 = arith.constant 0 : index
    %c0_24 = arith.constant 0 : index
    %43 = vector.load %arg8[%c0_23, %c0_24] : memref<16x1xf32, #tpu.memory_space<vmem>>, vector<16x1xf32>
    %cst_25 = arith.constant dense<0xFF800000> : vector<16xf32>
    %44 = vector.multi_reduction <maximumf>, %42, %cst_25 [1] : vector<16x128xf32> to vector<16xf32>
    %45 = vector.shape_cast %44 : vector<16xf32> to vector<16x1xf32>
    %46 = arith.maximumf %43, %45 : vector<16x1xf32>
    %cst_26 = arith.constant -1.000000e+30 : f32
    %47 = vector.broadcast %cst_26 : f32 to vector<16x1xf32>
    %48 = arith.maximumf %46, %47 : vector<16x1xf32>
    %c0_27 = arith.constant 0 : index
    %c0_28 = arith.constant 0 : index
    %49 = vector.load %arg9[%c0_27, %c0_28] : memref<16x1xf32, #tpu.memory_space<vmem>>, vector<16x1xf32>
    %50 = arith.subf %43, %48 : vector<16x1xf32>
    %51 = math.exp %50 : vector<16x1xf32>
    %52 = arith.mulf %49, %51 : vector<16x1xf32>
    %53 = vector.broadcast %48 : vector<16x1xf32> to vector<16x128xf32>
    %54 = arith.subf %42, %53 : vector<16x128xf32>
    %55 = math.exp %54 : vector<16x128xf32>
    %cst_29 = arith.constant dense<0.000000e+00> : vector<16xf32>
    %56 = vector.multi_reduction <add>, %55, %cst_29 [1] : vector<16x128xf32> to vector<16xf32>
    %57 = vector.shape_cast %56 : vector<16xf32> to vector<16x1xf32>
    %58 = arith.addf %52, %57 : vector<16x1xf32>
    %c0_30 = arith.constant 0 : index
    %c0_31 = arith.constant 0 : index
    %59 = vector.load %arg9[%c0_30, %c0_31] : memref<16x1xf32, #tpu.memory_space<vmem>>, vector<16x1xf32>
    tpu.vector_store %arg9[%c0_30, %c0_31], %58 {strides = array<i32>} : memref<16x1xf32, #tpu.memory_space<vmem>>, vector<16x1xf32>,
    %c0_32 = arith.constant 0 : index
    %c0_33 = arith.constant 0 : index
    %60 = vector.load %arg8[%c0_32, %c0_33] : memref<16x1xf32, #tpu.memory_space<vmem>>, vector<16x1xf32>
    tpu.vector_store %arg8[%c0_32, %c0_33], %48 {strides = array<i32>} : memref<16x1xf32, #tpu.memory_space<vmem>>, vector<16x1xf32>,
    %c2_i32 = arith.constant 2 : i32
    %61 = arith.cmpi eq, %arg1, %c2_i32 : i32
    %62 = arith.extui %61 : i1 to i32
    %c0_i32_34 = arith.constant 0 : i32
    %63 = arith.cmpi ne, %62, %c0_i32_34 : i32
    scf.if %63 {
      %c0_35 = arith.constant 0 : index
      %c0_36 = arith.constant 0 : index
      %64 = vector.load %arg10[%c0_35, %c0_36] : memref<16x1xf32, #tpu.memory_space<vmem>>, vector<16x1xf32>
      %cst_37 = arith.constant 1.350000e+00 : f32
      %65 = vector.broadcast %cst_37 : f32 to vector<16x1xf32>
      %66 = arith.subf %65, %64 : vector<16x1xf32>
      %cst_38 = arith.constant 0.000000e+00 : f32
      %67 = vector.broadcast %cst_38 : f32 to vector<16x1xf32>
      %68 = arith.maximumf %66, %67 : vector<16x1xf32>
      %cst_39 = arith.constant 3.000000e+01 : f32
      %69 = vector.broadcast %cst_39 : f32 to vector<16x1xf32>
      %70 = arith.mulf %69, %68 : vector<16x1xf32>
      %cst_40 = arith.constant 6.500000e-01 : f32
      %71 = vector.broadcast %cst_40 : f32 to vector<16x1xf32>
      %72 = arith.subf %64, %71 : vector<16x1xf32>
      %73 = arith.mulf %70, %72 : vector<16x1xf32>
      %c0_41 = arith.constant 0 : index
      %c0_42 = arith.constant 0 : index
      %74 = vector.load %arg8[%c0_41, %c0_42] : memref<16x1xf32, #tpu.memory_space<vmem>>, vector<16x1xf32>
      %75 = arith.maximumf %74, %73 : vector<16x1xf32>
      %c0_43 = arith.constant 0 : index
      %c0_44 = arith.constant 0 : index
      %76 = vector.load %arg9[%c0_43, %c0_44] : memref<16x1xf32, #tpu.memory_space<vmem>>, vector<16x1xf32>
      %c0_45 = arith.constant 0 : index
      %c0_46 = arith.constant 0 : index
      %77 = vector.load %arg8[%c0_45, %c0_46] : memref<16x1xf32, #tpu.memory_space<vmem>>, vector<16x1xf32>
      %78 = arith.subf %77, %75 : vector<16x1xf32>
      %79 = math.exp %78 : vector<16x1xf32>
      %80 = arith.mulf %76, %79 : vector<16x1xf32>
      %81 = arith.subf %73, %75 : vector<16x1xf32>
      %82 = math.exp %81 : vector<16x1xf32>
      %83 = arith.addf %80, %82 : vector<16x1xf32>
      %84 = math.log %83 : vector<16x1xf32>
      %85 = arith.addf %75, %84 : vector<16x1xf32>
      %86 = arith.subf %85, %73 : vector<16x1xf32>
      %c0_47 = arith.constant 0 : index
      %c0_48 = arith.constant 0 : index
      %87 = vector.load %arg7[%c0_47, %c0_48] : memref<16x1xf32, #tpu.memory_space<vmem>>, vector<16x1xf32>
      tpu.vector_store %arg7[%c0_47, %c0_48], %86 {strides = array<i32>} : memref<16x1xf32, #tpu.memory_space<vmem>>, vector<16x1xf32>,
      %c0_49 = arith.constant 0 : index
      %c0_50 = arith.constant 0 : index
      %88 = vector.load %arg6[%c0_49, %c0_50] : memref<16x1xf32, #tpu.memory_space<vmem>>, vector<16x1xf32>
      tpu.vector_store %arg6[%c0_49, %c0_50], %64 {strides = array<i32>} : memref<16x1xf32, #tpu.memory_space<vmem>>, vector<16x1xf32>,
    } else {
    }
    return
  }
  func.func @transform_0(%arg0: i32, %arg1: i32) -> (i32, i32) {
    %c0_i32 = arith.constant 0 : i32
    %c0_i32_0 = arith.constant 0 : i32
    return %arg0, %c0_i32 : i32, i32
  }
  func.func @transform_1(%arg0: i32, %arg1: i32) -> (i32, i32) {
    %c0_i32 = arith.constant 0 : i32
    %c0_i32_0 = arith.constant 0 : i32
    return %c0_i32, %arg1 : i32, i32
  }
  func.func @transform_2(%arg0: i32, %arg1: i32) -> (i32, i32) {
    %c0_i32 = arith.constant 0 : i32
    %c0_i32_0 = arith.constant 0 : i32
    return %arg0, %c0_i32 : i32, i32
  }
  func.func @transform_3(%arg0: i32, %arg1: i32) -> (i32, i32) {
    %c0_i32 = arith.constant 0 : i32
    return %arg0, %arg1 : i32, i32
  }
  func.func @transform_4(%arg0: i32, %arg1: i32) -> (i32, i32) {
    %c0_i32 = arith.constant 0 : i32
    %c0_i32_0 = arith.constant 0 : i32
    return %arg0, %c0_i32 : i32, i32
  }
  func.func @transform_5(%arg0: i32, %arg1: i32) -> (i32, i32) {
    %c0_i32 = arith.constant 0 : i32
    %c0_i32_0 = arith.constant 0 : i32
    return %arg0, %c0_i32 : i32, i32
  }
}

</mosaic_0001>

<llo_original>
// kernel: label_circle_loss_forward.1
$region0: #{label_circle_loss_forward.1}
  #allocation0 [shape = 'u32[]', space=smem, size = 0x4, offset = 0x4, fixed_abs, tag = 'smem constant byte address 0x4 - core index']
  #allocation1 [shape = 'u32[72,128]{1,0:T(1,128)}', space=vmem, size = 0x9000, scoped, tag = 'internal scratch']
  #allocation2 [shape = 'f32[16,1]{1,0:T(8,128)}', space=vmem, size = 0x2000, scoped, tag = 'scratch operand']
  #allocation3 [shape = 'f32[16,1]{1,0:T(8,128)}', space=vmem, size = 0x2000, scoped, tag = 'scratch operand']
  #allocation4 [shape = 'f32[16,1]{1,0:T(8,128)}', space=vmem, size = 0x2000, scoped, tag = 'scratch operand']
  %s0 = inlined_call_operand.vmem [shape: bf16[48,192], index: 0, kind: input, shape index: {}]
  %s1 = inlined_call_operand.vmem [shape: bf16[192,384], index: 1, kind: input, shape index: {}]
  %s2 = inlined_call_operand.vmem [shape: s32[48,1], index: 2, kind: input, shape index: {}]
  %s3 = inlined_call_operand.vmem [shape: bf16[48,384], index: 3, kind: output, shape index: {0}]
  %s4 = inlined_call_operand.vmem [shape: f32[48,1], index: 4, kind: output, shape index: {1}]
  %s5 = inlined_call_operand.vmem [shape: f32[48,1], index: 5, kind: output, shape index: {2}]
  %6 = xla_tuple %s3, %s4, %s5
  %s7 = sld [smem:[#allocation0]]
  $region147: #{label_circle_loss_forward.1} parent=0
    _
  %s9 = ssub.s32 1, %s7
  %s10 = scalar_select 0, %s9, %s7
  $region1: #{label_circle_loss_forward.1} parent=0
    #allocation5 [shape = 'u8[98304]{0}', space=vmem, size = 0x18000, scoped, tag = 'input window, operand 1']
    #allocation6 [shape = 'u8[8192]{0}', space=vmem, size = 0x2000, scoped, tag = 'output window, operand 0']
    loop: start=0, step=1, limit=11
    $region2: #{label_circle_loss_forward.1} parent=1 // loop_pre_header
      _
    $region3: #{label_circle_loss_forward.1} parent=1 // loop_header
      %s12 = sphi 0, %s16
      %p13 = scmp.ge.s32.totalorder %s12, 11
      %s19 = sphi 0, %s31
      %s20 = sphi 0, %s27
      %s21 = sphi 0, %s19
      %s22 = sphi 0, %s20
      %s23 = sphi 0, %s21
      %s24 = sphi 0, %s22
      %s34 = sphi 0, %s36
      %s37 = sphi 0, %s34
      %s38 = sphi 0, %s37
      %s54 = sphi 0, %s38
      %s60 = sphi 0, %s62
      %s63 = sphi 0, %s60
      %s64 = sphi 0, %s63
      %s80 = sphi 0, %s64
      %s86 = sphi 0, %s88
      %s89 = sphi 0, %s86
      %s90 = sphi 0, %s89
      %s106 = sphi 0, %s90
      %s114 = sphi 0, %s116
      %s117 = sphi 0, %s114
      %s118 = sphi 0, %s117
      %s134 = sphi 0, %s118
      %s140 = sphi 0, %s142
      %s143 = sphi 0, %s140
      %s144 = sphi 0, %s143
      %s160 = sphi 0, %s144
      %s166 = sphi 0, %s168
      %s169 = sphi 0, %s166
      %s170 = sphi 0, %s169
      %s186 = sphi 0, %s170
    $region4: #{label_circle_loss_forward.1} parent=1 // loop_header_branch
      %15 = sbr.rel (%p13) target = $region8
    $region5: #{label_circle_loss_forward.1} parent=1 // loop_body
      %s17 = ssub.s32 %s12, 1
      %s18 = ssub.s32 %s12, 2
      %s25 = sadd.s32 1, %s20
      %p26 = scmp.ge.s32.totalorder %s25, 3
      %s27 = scalar_select %p26, 0, %s25
      %s28 = sadd.s32 1, %s19
      %s29 = scalar_select %p26, %s28, %s19
      %p30 = scmp.ge.s32.totalorder %s29, 3
      %s31 = scalar_select %p30, 0, %s29
      %s32 = ssub.s32 %s19, %s31
      %p33 = scmp.eq.s32.totalorder %s32, 0
      %s35 = sadd.s32 %s34, 1
      %s36 = scalar_select %p33, %s34, %s35
      %p39 = pneg %p33
      %p40 = scmp.eq.s32.totalorder %s12, 8
      %p41 = por %p39, %p40
      %p42 = scmp.ne.s32.totalorder %s34, %s37
      %p43 = scmp.eq.s32.totalorder %s12, 0
      %p44 = por %p42, %p43
      %p45 = scmp.ne.s32.totalorder %s34, %s37
      %p46 = scmp.eq.s32.totalorder %s17, 8
      %p47 = por %p45, %p46
      %p48 = scmp.ne.s32.totalorder %s37, %s38
      %p49 = scmp.eq.s32.totalorder %s17, 0
      %p50 = por %p48, %p49
      %p51 = scmp.ne.s32.totalorder %s37, %s38
      %p52 = scmp.eq.s32.totalorder %s18, 8
      %p53 = por %p51, %p52
      %p55 = scmp.ne.s32.totalorder %s38, %s54
      %p56 = scmp.eq.s32.totalorder %s18, 0
      %p57 = por %p55, %p56
      %s58 = ssub.s32 %s20, %s27
      %p59 = scmp.eq.s32.totalorder %s58, 0
      %s61 = sadd.s32 %s60, 1
      %s62 = scalar_select %p59, %s60, %s61
      %p65 = pneg %p59
      %p66 = scmp.eq.s32.totalorder %s12, 8
      %p67 = por %p65, %p66
      %p68 = scmp.ne.s32.totalorder %s60, %s63
      %p69 = scmp.eq.s32.totalorder %s12, 0
      %p70 = por %p68, %p69
      %p71 = scmp.ne.s32.totalorder %s60, %s63
      %p72 = scmp.eq.s32.totalorder %s17, 8
      %p73 = por %p71, %p72
      %p74 = scmp.ne.s32.totalorder %s63, %s64
      %p75 = scmp.eq.s32.totalorder %s17, 0
      %p76 = por %p74, %p75
      %p77 = scmp.ne.s32.totalorder %s63, %s64
      %p78 = scmp.eq.s32.totalorder %s18, 8
      %p79 = por %p77, %p78
      %p81 = scmp.ne.s32.totalorder %s64, %s80
      %p82 = scmp.eq.s32.totalorder %s18, 0
      %p83 = por %p81, %p82
      %s84 = ssub.s32 %s19, %s31
      %p85 = scmp.eq.s32.totalorder %s84, 0
      %s87 = sadd.s32 %s86, 1
      %s88 = scalar_select %p85, %s86, %s87
      %p91 = pneg %p85
      %p92 = scmp.eq.s32.totalorder %s12, 8
      %p93 = por %p91, %p92
      %p94 = scmp.ne.s32.totalorder %s86, %s89
      %p95 = scmp.eq.s32.totalorder %s12, 0
      %p96 = por %p94, %p95
      %p97 = scmp.ne.s32.totalorder %s86, %s89
      %p98 = scmp.eq.s32.totalorder %s17, 8
      %p99 = por %p97, %p98
      %p100 = scmp.ne.s32.totalorder %s89, %s90
      %p101 = scmp.eq.s32.totalorder %s17, 0
      %p102 = por %p100, %p101
      %p103 = scmp.ne.s32.totalorder %s89, %s90
      %p104 = scmp.eq.s32.totalorder %s18, 8
      %p105 = por %p103, %p104
      %p107 = scmp.ne.s32.totalorder %s90, %s106
      %p108 = scmp.eq.s32.totalorder %s18, 0
      %p109 = por %p107, %p108
      %s110 = ssub.s32 %s19, %s31
      %s111 = ssub.s32 %s20, %s27
      %s112 = sor.u32 %s110, %s111
      %p113 = scmp.eq.s32.totalorder %s112, 0
      %s115 = sadd.s32 %s114, 1
      %s116 = scalar_select %p113, %s114, %s115
      %p119 = pneg %p113
      %p120 = scmp.eq.s32.totalorder %s12, 8
      %p121 = por %p119, %p120
      %p122 = scmp.ne.s32.totalorder %s114, %s117
      %p123 = scmp.eq.s32.totalorder %s12, 0
      %p124 = por %p122, %p123
      %p125 = scmp.ne.s32.totalorder %s114, %s117
      %p126 = scmp.eq.s32.totalorder %s17, 8
      %p127 = por %p125, %p126
      %p128 = scmp.ne.s32.totalorder %s117, %s118
      %p129 = scmp.eq.s32.totalorder %s17, 0
      %p130 = por %p128, %p129
      %p131 = scmp.ne.s32.totalorder %s117, %s118
      %p132 = scmp.eq.s32.totalorder %s18, 8
      %p133 = por %p131, %p132
      %p135 = scmp.ne.s32.totalorder %s118, %s134
      %p136 = scmp.eq.s32.totalorder %s18, 0
      %p137 = por %p135, %p136
      %s138 = ssub.s32 %s19, %s31
      %p139 = scmp.eq.s32.totalorder %s138, 0
      %s141 = sadd.s32 %s140, 1
      %s142 = scalar_select %p139, %s140, %s141
      %p145 = pneg %p139
      %p146 = scmp.eq.s32.totalorder %s12, 8
      %p147 = por %p145, %p146
      %p148 = scmp.ne.s32.totalorder %s140, %s143
      %p149 = scmp.eq.s32.totalorder %s12, 0
      %p150 = por %p148, %p149
      %p151 = scmp.ne.s32.totalorder %s140, %s143
      %p152 = scmp.eq.s32.totalorder %s17, 8
      %p153 = por %p151, %p152
      %p154 = scmp.ne.s32.totalorder %s143, %s144
      %p155 = scmp.eq.s32.totalorder %s17, 0
      %p156 = por %p154, %p155
      %p157 = scmp.ne.s32.totalorder %s143, %s144
      %p158 = scmp.eq.s32.totalorder %s18, 8
      %p159 = por %p157, %p158
      %p161 = scmp.ne.s32.totalorder %s144, %s160
      %p162 = scmp.eq.s32.totalorder %s18, 0
      %p163 = por %p161, %p162
      %s164 = ssub.s32 %s19, %s31
      %p165 = scmp.eq.s32.totalorder %s164, 0
      %s167 = sadd.s32 %s166, 1
      %s168 = scalar_select %p165, %s166, %s167
      %p171 = pneg %p165
      %p172 = scmp.eq.s32.totalorder %s12, 8
      %p173 = por %p171, %p172
      %p174 = scmp.ne.s32.totalorder %s166, %s169
      %p175 = scmp.eq.s32.totalorder %s12, 0
      %p176 = por %p174, %p175
      %p177 = scmp.ne.s32.totalorder %s166, %s169
      %p178 = scmp.eq.s32.totalorder %s17, 8
      %p179 = por %p177, %p178
      %p180 = scmp.ne.s32.totalorder %s169, %s170
      %p181 = scmp.eq.s32.totalorder %s17, 0
      %p182 = por %p180, %p181
      %p183 = scmp.ne.s32.totalorder %s169, %s170
      %p184 = scmp.eq.s32.totalorder %s18, 8
      %p185 = por %p183, %p184
      %p187 = scmp.ne.s32.totalorder %s170, %s186
      %p188 = scmp.eq.s32.totalorder %s18, 0
      %p189 = por %p187, %p188
      %p190 = scmp.le.s32.totalorder 1, %s12
      %p191 = scmp.lt.s32.totalorder %s12, 10
      %p192 = pnand %p190, %p191
      %p193 = pneg %p192
      // Predicated region
      $region9: #{label_circle_loss_forward.1} parent=5 // pred_check
        _
      $region10: #{label_circle_loss_forward.1} parent=5 // pred_check_branch
        %195 = sbr.rel (%p192) target = $region12
      $region11: #{label_circle_loss_forward.1} parent=5 // pred_region
        %s196 = ssub.s32 %s12, 1
      $region12: #{label_circle_loss_forward.1} parent=5 // pred_fallthru
        _
      %p197 = scmp.lt.s32.totalorder %s12, 9
      // Predicated region
      $region13: #{label_circle_loss_forward.1} parent=5 // pred_check
        %p198 = pneg %p197
      $region14: #{label_circle_loss_forward.1} parent=5 // pred_check_branch
        %200 = sbr.rel (%p198) target = $region16
      $region15: #{label_circle_loss_forward.1} parent=5 // pred_region
        // Predicated region
        $region17: #{label_circle_loss_forward.1} parent=15 // pred_check
          %p201 = pneg %p44
        $region18: #{label_circle_loss_forward.1} parent=15 // pred_check_branch
          %203 = sbr.rel (%p201) target = $region20
        $region19: #{label_circle_loss_forward.1} parent=15 // pred_region
          %s204 = smul.u32 2, %s19
          %p205 = scmp.lt.s32.totalorder %s204, 5
          %s206 = scalar_select %p205, %s204, 5
          %s207 = smul.addr %s206, 2
          %s208 = smul.addr %s207, 4
          %s209 = scalar_lea.vmem %s0, %s208
          %s210 = smul.u32 2, %s19
        $region20: #{label_circle_loss_forward.1} parent=15 // pred_fallthru
          _
        // Predicated region
        $region21: #{label_circle_loss_forward.1} parent=15 // pred_check
          %p211 = pneg %p70
        $region22: #{label_circle_loss_forward.1} parent=15 // pred_check_branch
          %213 = sbr.rel (%p211) target = $region24
        $region23: #{label_circle_loss_forward.1} parent=15 // pred_region
          %s214 = sand.u32 %s60, 1
          %s215 = sand.u32 %s60, 1
          %s216 = smul.addr %s215, 96
          %s217 = scalar_lea.vmem [#allocation5], %s216
          %s218 = smul.addr %s20, 4
          %s219 = scalar_lea.vmem %s1, %s218
          // Predicated region
          $region25: #{label_circle_loss_forward.1} parent=23 // pred_check
            _
          $region26: #{label_circle_loss_forward.1} parent=23 // pred_check_branch
            %221 = sbr.rel (0) target = $region28
          $region27: #{label_circle_loss_forward.1} parent=23 // pred_region
            // Predicated region
            $region29: #{label_circle_loss_forward.1} parent=27 // pred_check
              _
            $region30: #{label_circle_loss_forward.1} parent=27 // pred_check_branch
              %223 = sbr.rel target = $region32
            $region31: #{label_circle_loss_forward.1} parent=27 // pred_region
              // Predicated region
              $region44: #{label_circle_loss_forward.1} parent=31 // pred_check
                _
              $region45: #{label_circle_loss_forward.1} parent=31 // pred_check_branch
                %285 = sbr.rel (0) target = $region47
              $region46: #{label_circle_loss_forward.1} parent=31 // pred_region
                loop: start=0, step=1, limit=1
                $region48: #{label_circle_loss_forward.1} parent=46 // loop_pre_header
                  _
                $region49: #{label_circle_loss_forward.1} parent=46 // loop_header
                  %s287 = sphi 0, %s291
                  %p288 = scmp.ge.s32.totalorder %s287, 1
                  %s292 = sphi %s219, %s219
                  %s293 = sphi %s217, %s217
                $region50: #{label_circle_loss_forward.1} parent=46 // loop_header_branch
                  %290 = sbr.rel (%p288) target = $region54
                $region51: #{label_circle_loss_forward.1} parent=46 // loop_body
                  _
                $region52: #{label_circle_loss_forward.1} parent=46 // loop_footer
                  %s291 = sadd.s32 1, %s287
                $region53: #{label_circle_loss_forward.1} parent=46 // loop_footer_branch
                  %286 = sbr.rel target = $region49
                $region54: #{label_circle_loss_forward.1} parent=46 // loop_exit
                  _
                %s295 = ssub.s32 16, 1
                loop: start=0, step=1, limit=1
                $region55: #{label_circle_loss_forward.1} parent=46 // loop_pre_header
                  _
                $region56: #{label_circle_loss_forward.1} parent=46 // loop_header
                  %s297 = sphi 0, %s301
                  %p298 = scmp.ge.s32.totalorder %s297, 1
                  %s302 = sphi %s219, %s219
                  %s303 = sphi %s217, %s217
                $region57: #{label_circle_loss_forward.1} parent=46 // loop_header_branch
                  %300 = sbr.rel (%p298) target = $region61
                $region58: #{label_circle_loss_forward.1} parent=46 // loop_body
                  %v304 = vld [vmem:[%s302] sm:%s295]
                  %305 = vst [vmem:[%s303] sm:%s295] %v304
                  %v306 = vld [vmem:[%s302 + $0xc] sm:%s295]
                  %307 = vst [vmem:[%s303 + $0x4] sm:%s295] %v306
                  %v308 = vld [vmem:[%s302 + $0x18] sm:%s295]
                  %309 = vst [vmem:[%s303 + $0x8] sm:%s295] %v308
                  %v310 = vld [vmem:[%s302 + $0x24] sm:%s295]
                  %311 = vst [vmem:[%s303 + $0xc] sm:%s295] %v310
                  %v312 = vld [vmem:[%s302 + $0x30] sm:%s295]
                  %313 = vst [vmem:[%s303 + $0x10] sm:%s295] %v312
                  %v314 = vld [vmem:[%s302 + $0x3c] sm:%s295]
                  %315 = vst [vmem:[%s303 + $0x14] sm:%s295] %v314
                  %v316 = vld [vmem:[%s302 + $0x48] sm:%s295]
                  %317 = vst [vmem:[%s303 + $0x18] sm:%s295] %v316
                  %v318 = vld [vmem:[%s302 + $0x54] sm:%s295]
                  %319 = vst [vmem:[%s303 + $0x1c] sm:%s295] %v318
                  %v320 = vld [vmem:[%s302 + $0x60] sm:%s295]
                  %321 = vst [vmem:[%s303 + $0x20] sm:%s295] %v320
                  %v322 = vld [vmem:[%s302 + $0x6c] sm:%s295]
                  %323 = vst [vmem:[%s303 + $0x24] sm:%s295] %v322
                  %v324 = vld [vmem:[%s302 + $0x78] sm:%s295]
                  %325 = vst [vmem:[%s303 + $0x28] sm:%s295] %v324
                  %v326 = vld [vmem:[%s302 + $0x84] sm:%s295]
                  %327 = vst [vmem:[%s303 + $0x2c] sm:%s295] %v326
                  %v328 = vld [vmem:[%s302 + $0x90] sm:%s295]
                  %329 = vst [vmem:[%s303 + $0x30] sm:%s295] %v328
                  %v330 = vld [vmem:[%s302 + $0x9c] sm:%s295]
                  %331 = vst [vmem:[%s303 + $0x34] sm:%s295] %v330
                  %v332 = vld [vmem:[%s302 + $0xa8] sm:%s295]
                  %333 = vst [vmem:[%s303 + $0x38] sm:%s295] %v332
                  %v334 = vld [vmem:[%s302 + $0xb4] sm:%s295]
                  %335 = vst [vmem:[%s303 + $0x3c] sm:%s295] %v334
                  %v336 = vld [vmem:[%s302 + $0xc0] sm:%s295]
                  %337 = vst [vmem:[%s303 + $0x40] sm:%s295] %v336
                  %v338 = vld [vmem:[%s302 + $0xcc] sm:%s295]
                  %339 = vst [vmem:[%s303 + $0x44] sm:%s295] %v338
                  %v340 = vld [vmem:[%s302 + $0xd8] sm:%s295]
                  %341 = vst [vmem:[%s303 + $0x48] sm:%s295] %v340
                  %v342 = vld [vmem:[%s302 + $0xe4] sm:%s295]
                  %343 = vst [vmem:[%s303 + $0x4c] sm:%s295] %v342
                  %v344 = vld [vmem:[%s302 + $0xf0] sm:%s295]
                  %345 = vst [vmem:[%s303 + $0x50] sm:%s295] %v344
                  %v346 = vld [vmem:[%s302 + $0xfc] sm:%s295]
                  %347 = vst [vmem:[%s303 + $0x54] sm:%s295] %v346
                  %v348 = vld [vmem:[%s302 + $0x108] sm:%s295]
                  %349 = vst [vmem:[%s303 + $0x58] sm:%s295] %v348
                  %v350 = vld [vmem:[%s302 + $0x114] sm:%s295]
                  %351 = vst [vmem:[%s303 + $0x5c] sm:%s295] %v350
                $region59: #{label_circle_loss_forward.1} parent=46 // loop_footer
                  %s301 = sadd.s32 1, %s297
                $region60: #{label_circle_loss_forward.1} parent=46 // loop_footer_branch
                  %296 = sbr.rel target = $region56
                $region61: #{label_circle_loss_forward.1} parent=46 // loop_exit
                  _
              $region47: #{label_circle_loss_forward.1} parent=31 // pred_fallthru
                _
            $region32: #{label_circle_loss_forward.1} parent=27 // pred_fallthru
              _
            // Predicated region
            $region33: #{label_circle_loss_forward.1} parent=27 // pred_check
              _
            $region34: #{label_circle_loss_forward.1} parent=27 // pred_check_branch
              %225 = sbr.rel (0) target = $region36
            $region35: #{label_circle_loss_forward.1} parent=27 // pred_region
              %s227 = ssub.s32 16, 1
              loop: start=0, step=1, limit=1
              $region37: #{label_circle_loss_forward.1} parent=35 // loop_pre_header
                _
              $region38: #{label_circle_loss_forward.1} parent=35 // loop_header
                %s229 = sphi 0, %s233
                %p230 = scmp.ge.s32.totalorder %s229, 1
                %s234 = sphi %s219, %s219
                %s235 = sphi %s217, %s217
              $region39: #{label_circle_loss_forward.1} parent=35 // loop_header_branch
                %232 = sbr.rel (%p230) target = $region43
              $region40: #{label_circle_loss_forward.1} parent=35 // loop_body
                %v236 = vld [vmem:[%s234] sm:%s227]
                %237 = vst [vmem:[%s235] sm:%s227] %v236
                %v238 = vld [vmem:[%s234 + $0xc] sm:%s227]
                %239 = vst [vmem:[%s235 + $0x4] sm:%s227] %v238
                %v240 = vld [vmem:[%s234 + $0x18] sm:%s227]
                %241 = vst [vmem:[%s235 + $0x8] sm:%s227] %v240
                %v242 = vld [vmem:[%s234 + $0x24] sm:%s227]
                %243 = vst [vmem:[%s235 + $0xc] sm:%s227] %v242
                %v244 = vld [vmem:[%s234 + $0x30] sm:%s227]
                %245 = vst [vmem:[%s235 + $0x10] sm:%s227] %v244
                %v246 = vld [vmem:[%s234 + $0x3c] sm:%s227]
                %247 = vst [vmem:[%s235 + $0x14] sm:%s227] %v246
                %v248 = vld [vmem:[%s234 + $0x48] sm:%s227]
                %249 = vst [vmem:[%s235 + $0x18] sm:%s227] %v248
                %v250 = vld [vmem:[%s234 + $0x54] sm:%s227]
                %251 = vst [vmem:[%s235 + $0x1c] sm:%s227] %v250
                %v252 = vld [vmem:[%s234 + $0x60] sm:%s227]
                %253 = vst [vmem:[%s235 + $0x20] sm:%s227] %v252
                %v254 = vld [vmem:[%s234 + $0x6c] sm:%s227]
                %255 = vst [vmem:[%s235 + $0x24] sm:%s227] %v254
                %v256 = vld [vmem:[%s234 + $0x78] sm:%s227]
                %257 = vst [vmem:[%s235 + $0x28] sm:%s227] %v256
                %v258 = vld [vmem:[%s234 + $0x84] sm:%s227]
                %259 = vst [vmem:[%s235 + $0x2c] sm:%s227] %v258
                %v260 = vld [vmem:[%s234 + $0x90] sm:%s227]
                %261 = vst [vmem:[%s235 + $0x30] sm:%s227] %v260
                %v262 = vld [vmem:[%s234 + $0x9c] sm:%s227]
                %263 = vst [vmem:[%s235 + $0x34] sm:%s227] %v262
                %v264 = vld [vmem:[%s234 + $0xa8] sm:%s227]
                %265 = vst [vmem:[%s235 + $0x38] sm:%s227] %v264
                %v266 = vld [vmem:[%s234 + $0xb4] sm:%s227]
                %267 = vst [vmem:[%s235 + $0x3c] sm:%s227] %v266
                %v268 = vld [vmem:[%s234 + $0xc0] sm:%s227]
                %269 = vst [vmem:[%s235 + $0x40] sm:%s227] %v268
                %v270 = vld [vmem:[%s234 + $0xcc] sm:%s227]
                %271 = vst [vmem:[%s235 + $0x44] sm:%s227] %v270
                %v272 = vld [vmem:[%s234 + $0xd8] sm:%s227]
                %273 = vst [vmem:[%s235 + $0x48] sm:%s227] %v272
                %v274 = vld [vmem:[%s234 + $0xe4] sm:%s227]
                %275 = vst [vmem:[%s235 + $0x4c] sm:%s227] %v274
                %v276 = vld [vmem:[%s234 + $0xf0] sm:%s227]
                %277 = vst [vmem:[%s235 + $0x50] sm:%s227] %v276
                %v278 = vld [vmem:[%s234 + $0xfc] sm:%s227]
                %279 = vst [vmem:[%s235 + $0x54] sm:%s227] %v278
                %v280 = vld [vmem:[%s234 + $0x108] sm:%s227]
                %281 = vst [vmem:[%s235 + $0x58] sm:%s227] %v280
                %v282 = vld [vmem:[%s234 + $0x114] sm:%s227]
                %283 = vst [vmem:[%s235 + $0x5c] sm:%s227] %v282
              $region41: #{label_circle_loss_forward.1} parent=35 // loop_footer
                %s233 = sadd.s32 1, %s229
              $region42: #{label_circle_loss_forward.1} parent=35 // loop_footer_branch
                %228 = sbr.rel target = $region38
              $region43: #{label_circle_loss_forward.1} parent=35 // loop_exit
                _
            $region36: #{label_circle_loss_forward.1} parent=27 // pred_fallthru
              _
          $region28: #{label_circle_loss_forward.1} parent=23 // pred_fallthru
            _
          %352 = vnop
        $region24: #{label_circle_loss_forward.1} parent=15 // pred_fallthru
          _
        // Predicated region
        $region62: #{label_circle_loss_forward.1} parent=15 // pred_check
          %p353 = pneg %p96
        $region63: #{label_circle_loss_forward.1} parent=15 // pred_check_branch
          %355 = sbr.rel (%p353) target = $region65
        $region64: #{label_circle_loss_forward.1} parent=15 // pred_region
          %s356 = smul.u32 2, %s19
          %p357 = scmp.lt.s32.totalorder %s356, 5
          %s358 = scalar_select %p357, %s356, 5
          %s359 = smul.addr %s358, 8
          %s360 = scalar_lea.vmem %s2, %s359
          %s361 = smul.u32 2, %s19
        $region65: #{label_circle_loss_forward.1} parent=15 // pred_fallthru
          _
      $region16: #{label_circle_loss_forward.1} parent=5 // pred_fallthru
        _
      %p362 = scmp.le.s32.totalorder 1, %s12
      %p363 = scmp.lt.s32.totalorder %s12, 10
      %p364 = pnand %p362, %p363
      %p365 = pneg %p364
      // Predicated region
      $region66: #{label_circle_loss_forward.1} parent=5 // pred_check
        _
      $region67: #{label_circle_loss_forward.1} parent=5 // pred_check_branch
        %367 = sbr.rel (%p364) target = $region69
      $region68: #{label_circle_loss_forward.1} parent=5 // pred_region
        %s368 = ssub.s32 %s12, 1
        %s369 = sand.u32 %s63, 1
        %s370 = sand.u32 %s63, 1
        %s371 = smul.addr %s370, 96
        %s372 = scalar_lea.vmem [#allocation5], %s371
        // Predicated region
        $region70: #{label_circle_loss_forward.1} parent=68 // pred_check
          %p373 = pneg %p76
        $region71: #{label_circle_loss_forward.1} parent=68 // pred_check_branch
          %375 = sbr.rel (%p373) target = $region73
        $region72: #{label_circle_loss_forward.1} parent=68 // pred_region
          _
        $region73: #{label_circle_loss_forward.1} parent=68 // pred_fallthru
          _
        %s376 = smul.u32 2, %s21
        %p377 = scmp.lt.s32.totalorder %s376, 5
        %s378 = scalar_select %p377, %s376, 5
        %s379 = smul.addr %s378, 2
        %s380 = smul.addr %s379, 4
        %s381 = scalar_lea.vmem %s0, %s380
        %p382 = pneg %p50
        %p383 = pneg %p47
        %s384 = sand.u32 %s63, 1
        %s385 = sand.u32 %s63, 1
        %s386 = smul.addr %s385, 96
        %s387 = scalar_lea.vmem [#allocation5], %s386
        %p388 = pneg %p76
        %p389 = pneg %p73
        %s390 = smul.u32 2, %s21
        %p391 = scmp.lt.s32.totalorder %s390, 5
        %s392 = scalar_select %p391, %s390, 5
        %s393 = smul.addr %s392, 8
        %s394 = scalar_lea.vmem %s2, %s393
        %p395 = pneg %p102
        %p396 = pneg %p99
        %p397 = pneg %p130
        %p398 = pneg %p127
        %s399 = sand.u32 %s117, 1
        %s400 = sand.u32 %s117, 1
        %s401 = smul.addr %s400, 8
        %s402 = scalar_lea.vmem [#allocation6], %s401
        %p403 = pneg %p156
        %p404 = pneg %p153
        %s405 = smul.u32 2, %s21
        %p406 = scmp.lt.s32.totalorder %s405, 5
        %s407 = scalar_select %p406, %s405, 5
        %s408 = smul.addr %s407, 8
        %s409 = scalar_lea.vmem %s4, %s408
        %p410 = pneg %p182
        %p411 = pneg %p179
        %s412 = smul.u32 2, %s21
        %p413 = scmp.lt.s32.totalorder %s412, 5
        %s414 = scalar_select %p413, %s412, 5
        %s415 = smul.addr %s414, 8
        %s416 = scalar_lea.vmem %s5, %s415
        %s417 = smul.u32 2, %s21
        %p418 = scmp.lt.s32.totalorder %s417, 5
        %s419 = scalar_select %p418, %s417, 5
        %s420 = smul.addr %s419, 2
        %s421 = smul.addr %s420, 4
        %s422 = scalar_lea.vmem %s0, %s421
        %s423 = smul.u32 2, %s21
        %s424 = smul.u32 2, %s21
        %p425 = scmp.lt.s32.totalorder %s424, 5
        %s426 = scalar_select %p425, %s424, 5
        %s427 = smul.addr %s426, 8
        %s428 = scalar_lea.vmem %s2, %s427
        %s429 = smul.u32 2, %s21
        %s430 = smul.u32 2, %s21
        %s431 = smul.u32 2, %s21
        %p432 = scmp.lt.s32.totalorder %s431, 5
        %s433 = scalar_select %p432, %s431, 5
        %s434 = smul.addr %s433, 8
        %s435 = scalar_lea.vmem %s4, %s434
        %s436 = smul.u32 2, %s21
        %s437 = smul.u32 2, %s21
        %p438 = scmp.lt.s32.totalorder %s437, 5
        %s439 = scalar_select %p438, %s437, 5
        %s440 = smul.addr %s439, 8
        %s441 = scalar_lea.vmem %s5, %s440
        %s442 = smul.u32 2, %s21
        %p444 = scmp.eq.s32.totalorder %s22, 0
        // Predicated region
        $region74: #{label_circle_loss_forward.1} parent=68 // pred_check
          %p445 = pneg %p444
        $region75: #{label_circle_loss_forward.1} parent=68 // pred_check_branch
          %447 = sbr.rel (%p445) target = $region77
        $region76: #{label_circle_loss_forward.1} parent=68 // pred_region
          %vm448 = vcmask 7168
          %449 = vst.msk [vmem:[#allocation2] sm:$0xff] %vm448, -inf
          %450 = vst.msk [vmem:[#allocation2 + $0x8] sm:$0xff] %vm448, -inf
          %451 = vst.msk [vmem:[#allocation3] sm:$0xff] %vm448, 0.0
          %452 = vst.msk [vmem:[#allocation3 + $0x8] sm:$0xff] %vm448, 0.0
          %453 = vst.msk [vmem:[#allocation4] sm:$0xff] %vm448, 0.0
          %454 = vst.msk [vmem:[#allocation4 + $0x8] sm:$0xff] %vm448, 0.0
        $region77: #{label_circle_loss_forward.1} parent=68 // pred_fallthru
          _
        %v455 = vld [vmem:[%s422] sm:$0xff]
        %v456 = vld [vmem:[%s422 + $0x8] sm:$0xff]
        %v457 = vld [vmem:[%s372] sm:$0xf]
        %v458 = vld [vmem:[%s372 + $0x4] sm:$0xf]
        %v459 = vld [vmem:[%s372 + $0x8] sm:$0xf]
        %v460 = vld [vmem:[%s372 + $0xc] sm:$0xf]
        %v461 = vld [vmem:[%s372 + $0x10] sm:$0xf]
        %v462 = vld [vmem:[%s372 + $0x14] sm:$0xf]
        %v463 = vld [vmem:[%s372 + $0x18] sm:$0xf]
        %v464 = vld [vmem:[%s372 + $0x1c] sm:$0xf]
        %v465 = vld [vmem:[%s372 + $0x20] sm:$0xf]
        %v466 = vld [vmem:[%s372 + $0x24] sm:$0xf]
        %v467 = vld [vmem:[%s372 + $0x28] sm:$0xf]
        %v468 = vld [vmem:[%s372 + $0x2c] sm:$0xf]
        %v469 = vld [vmem:[%s372 + $0x30] sm:$0xf]
        %v470 = vld [vmem:[%s372 + $0x34] sm:$0xf]
        %v471 = vld [vmem:[%s372 + $0x38] sm:$0xf]
        %v472 = vld [vmem:[%s372 + $0x3c] sm:$0xf]
        %v473 = vld [vmem:[%s372 + $0x40] sm:$0xf]
        %v474 = vld [vmem:[%s372 + $0x44] sm:$0xf]
        %v475 = vld [vmem:[%s372 + $0x48] sm:$0xf]
        %v476 = vld [vmem:[%s372 + $0x4c] sm:$0xf]
        %v477 = vld [vmem:[%s372 + $0x50] sm:$0xf]
        %v478 = vld [vmem:[%s372 + $0x54] sm:$0xf]
        %v479 = vld [vmem:[%s372 + $0x58] sm:$0xf]
        %v480 = vld [vmem:[%s372 + $0x5c] sm:$0xf]
        %v483 = vunpack.c.l.b16 %v455
        %v484 = vunpack.c.h.b16 %v455
        %v485 = vunpack.c.l.b16 %v456
        %v486 = vunpack.c.h.b16 %v456
        %v487 = vpack.c.b16 %v485, %v483
        %v488 = vpack.c.b16 %v486, %v484
        %v514 = vunpack.c.l.b16 %v457
        %v515 = vunpack.c.l.b16 %v458
        %v516 = vunpack.c.l.b16 %v459
        %v517 = vunpack.c.l.b16 %v460
        %v518 = vunpack.c.l.b16 %v461
        %v519 = vunpack.c.l.b16 %v462
        %v520 = vunpack.c.l.b16 %v463
        %v521 = vunpack.c.l.b16 %v464
        %v522 = vunpack.c.l.b16 %v465
        %v523 = vunpack.c.l.b16 %v466
        %v524 = vunpack.c.l.b16 %v467
        %v525 = vunpack.c.l.b16 %v468
        %v526 = vunpack.c.l.b16 %v469
        %v527 = vunpack.c.l.b16 %v470
        %v528 = vunpack.c.l.b16 %v471
        %v529 = vunpack.c.l.b16 %v472
        %v530 = vunpack.c.l.b16 %v473
        %v531 = vunpack.c.l.b16 %v474
        %v532 = vunpack.c.l.b16 %v475
        %v533 = vunpack.c.l.b16 %v476
        %v534 = vunpack.c.l.b16 %v477
        %v535 = vunpack.c.l.b16 %v478
        %v536 = vunpack.c.l.b16 %v479
        %v537 = vunpack.c.l.b16 %v480
        %v538 = vpack.c.b16 %v515, %v514
        %v539 = vpack.c.b16 %v517, %v516
        %v540 = vpack.c.b16 %v519, %v518
        %v541 = vpack.c.b16 %v521, %v520
        %v542 = vpack.c.b16 %v523, %v522
        %v543 = vpack.c.b16 %v525, %v524
        %v544 = vpack.c.b16 %v527, %v526
        %v545 = vpack.c.b16 %v529, %v528
        %v546 = vpack.c.b16 %v531, %v530
        %v547 = vpack.c.b16 %v533, %v532
        %v548 = vpack.c.b16 %v535, %v534
        %v549 = vpack.c.b16 %v537, %v536
        %vm562 = vcmask 523264
        %v564 = vsel %vm562, %v488, 0
        %566 = vmatpush.bf16.msra.mxu0 %v545
        %567 = vmatpush.bf16.msra.mxu0 %v544
        %568 = vmatpush.bf16.msra.mxu0 %v543
        %569 = vmatpush.bf16.msra.mxu0 %v542
        %570 = vmatpush.bf16.msra.mxu0 %v541
        %571 = vmatpush.bf16.msra.mxu0 %v540
        %572 = vmatpush.bf16.msra.mxu0 %v539
        %573 = vmatpush.bf16.msra.mxu0 %v538
        %574 = vmatmul.bf16.gmra.mxu0 %v487
        %v575 = vpop.f32.mrf.mxu0
        %v576 = vadd.f32 0.0, %v575
        %v577 = vpop.f32.mrf.mxu0
        %v578 = vadd.f32 0.0, %v577
        %579 = vdwg.mxu0
        %580 = vmatpush.bf16.msra.mxu0 0
        %581 = vmatpush.bf16.msra.mxu0 0
        %582 = vmatpush.bf16.msra.mxu0 0
        %583 = vmatpush.bf16.msra.mxu0 0
        %584 = vmatpush.bf16.msra.mxu0 %v549
        %585 = vmatpush.bf16.msra.mxu0 %v548
        %586 = vmatpush.bf16.msra.mxu0 %v547
        %587 = vmatpush.bf16.msra.mxu0 %v546
        %588 = vmatmul.bf16.gmra.mxu0 %v564
        %v589 = vpop.f32.mrf.mxu0
        %v590 = vadd.f32 %v576, %v589
        %v591 = vpop.f32.mrf.mxu0
        %v592 = vadd.f32 %v578, %v591
        %593 = vdwg.mxu0
        %v594 = vmax.f32 %v590, -1.0
        %v595 = vmax.f32 %v592, -1.0
        %v596 = vmin.f32 %v594, 1.0
        %v597 = vmin.f32 %v595, 1.0
        %v598 = vpack.c.bf16 %v596, %v596
        %v599 = vpack.c.bf16 %v597, %v597
        %600 = vst [vmem:[%s402] sm:$0xf] %v598
        %601 = vst [vmem:[%s402 + $0x4] sm:$0xf] %v599
        %v602 = vlaneseq
        %v603 = vand.u32 %v602, 127
        %v604 = vld [vmem:[%s428] sm:$0xff]
        %v605 = vld [vmem:[%s428 + $0x8] sm:$0xff]
        %s606 = smul.u32 %s22, 128
        %v607 = vstv %s606
        %v608 = vsub.s32 %v604, %v607
        %v609 = vsub.s32 %v605, %v607
        %610 = vset.pattern.permute.xlu0 0
        %611 = vperm.xlu0 %610, %v608
        %v612 = vpop.permute.xlu0 %611
        %613 = vset.pattern.permute.xlu0 0
        %614 = vperm.xlu0 %613, %v609
        %v615 = vpop.permute.xlu0 %614
        %vm616 = vcmp.eq.s32.totalorder %v603, %v612
        %vm617 = vcmp.eq.s32.totalorder %v603, %v615
        %v618 = vld [vmem:[#allocation4] sm:$0xff]
        %v619 = vld [vmem:[#allocation4 + $0x8] sm:$0xff]
        %v620 = vsel %vm616, %v596, 0.0
        %v621 = vsel %vm617, %v597, 0.0
        %622 = vadd.xlane.f32.xlu0 %v620
        %v623 = vpop.xlane.xlu0 %622
        %624 = vadd.xlane.f32.xlu0 %v621
        %v625 = vpop.xlane.xlu0 %624
        %v626 = vadd.f32 %v618, %v623
        %v627 = vadd.f32 %v619, %v625
        %vm628 = vcmask 7168
        %629 = vst.msk [vmem:[#allocation4] sm:$0xff] %vm628, %v626
        %630 = vst.msk [vmem:[#allocation4 + $0x8] sm:$0xff] %vm628, %v627
        %v631 = vadd.f32 %v596, 0.35
        %v632 = vadd.f32 %v597, 0.35
        %v633 = vmax.f32 %v631, 0.0
        %v634 = vmax.f32 %v632, 0.0
        %v635 = vmul.f32 %v633, 30.0
        %v636 = vmul.f32 %v634, 30.0
        %v637 = vsub.f32 %v596, 0.35
        %v638 = vsub.f32 %v597, 0.35
        %v639 = vmul.f32 %v635, %v637
        %v640 = vmul.f32 %v636, %v638
        %vm641 = vmxor %vm616, 1
        %vm642 = vmxor %vm617, 1
        %s643 = ssub.s32 300, %s606
        %v644 = vstv %s643
        %vm645 = vcmp.lt.s32.totalorder %v603, %v644
        %vm646 = vmand %vm641, %vm645
        %vm647 = vmand %vm642, %vm645
        %v648 = vsel %vm646, %v639, -inf
        %v649 = vsel %vm647, %v640, -inf
        %v650 = vld [vmem:[#allocation2] sm:$0xff]
        %v651 = vld [vmem:[#allocation2 + $0x8] sm:$0xff]
        %652 = vmax.xlane.f32.xlu0 %v648
        %v653 = vpop.xlane.xlu0 %652
        %654 = vmax.xlane.f32.xlu0 %v649
        %v655 = vpop.xlane.xlu0 %654
        %v656 = vmax.f32 %v650, %v653
        %v657 = vmax.f32 %v651, %v655
        %v658 = vmax.f32 %v656, -1e+30
        %v659 = vmax.f32 %v657, -1e+30
        %v660 = vld [vmem:[#allocation3] sm:$0xff]
        %v661 = vld [vmem:[#allocation3 + $0x8] sm:$0xff]
        %v662 = vsub.f32 %v650, %v658
        %v663 = vsub.f32 %v651, %v659
        %v664 = vmul.f32 %v662, 1.442695
        %v665 = vpow.pop %v664
        %v666 = vmul.f32 %v663, 1.442695
        %v667 = vpow.pop %v666
        %v668 = vmul.f32 %v660, %v665
        %v669 = vmul.f32 %v661, %v667
        %671 = vset.pattern.permute.xlu0 0
        %672 = vperm.xlu0 %671, %v658
        %v673 = vpop.permute.xlu0 %672
        %676 = vset.pattern.permute.xlu0 0
        %677 = vperm.xlu0 %676, %v659
        %v678 = vpop.permute.xlu0 %677
        %v680 = vsub.f32 %v648, %v673
        %v681 = vsub.f32 %v649, %v678
        %v682 = vmul.f32 %v680, 1.442695
        %v683 = vpow.pop %v682
        %v684 = vmul.f32 %v681, 1.442695
        %v685 = vpow.pop %v684
        %686 = vadd.xlane.f32.xlu0 %v683
        %v687 = vpop.xlane.xlu0 %686
        %688 = vadd.xlane.f32.xlu0 %v685
        %v689 = vpop.xlane.xlu0 %688
        %v690 = vadd.f32 %v668, %v687
        %v691 = vadd.f32 %v669, %v689
        %692 = vst.msk [vmem:[#allocation3] sm:$0xff] %vm628, %v690
        %693 = vst.msk [vmem:[#allocation3 + $0x8] sm:$0xff] %vm628, %v691
        %694 = vst.msk [vmem:[#allocation2] sm:$0xff] %vm628, %v658
        %695 = vst.msk [vmem:[#allocation2 + $0x8] sm:$0xff] %vm628, %v659
        %p696 = scmp.eq.s32.totalorder %s22, 2
        // Predicated region
        $region78: #{label_circle_loss_forward.1} parent=68 // pred_check
          %p697 = pneg %p696
        $region79: #{label_circle_loss_forward.1} parent=68 // pred_check_branch
          %699 = sbr.rel (%p697) target = $region81
        $region80: #{label_circle_loss_forward.1} parent=68 // pred_region
          %v700 = vld [vmem:[#allocation4] sm:$0xff]
          %v701 = vld [vmem:[#allocation4 + $0x8] sm:$0xff]
          %v702 = vsub.f32 1.35, %v700
          %v703 = vsub.f32 1.35, %v701
          %v704 = vmax.f32 %v702, 0.0
          %v705 = vmax.f32 %v703, 0.0
          %v706 = vmul.f32 %v704, 30.0
          %v707 = vmul.f32 %v705, 30.0
          %v708 = vsub.f32 %v700, 0.65
          %v709 = vsub.f32 %v701, 0.65
          %v710 = vmul.f32 %v706, %v708
          %v711 = vmul.f32 %v707, %v709
          %v712 = vld [vmem:[#allocation2] sm:$0xff]
          %v713 = vld [vmem:[#allocation2 + $0x8] sm:$0xff]
          %v714 = vmax.f32 %v712, %v710
          %v715 = vmax.f32 %v713, %v711
          %v716 = vld [vmem:[#allocation3] sm:$0xff]
          %v717 = vld [vmem:[#allocation3 + $0x8] sm:$0xff]
          %v718 = vsub.f32 %v712, %v714
          %v719 = vsub.f32 %v713, %v715
          %v720 = vmul.f32 %v718, 1.442695
          %v721 = vpow.pop %v720
          %v722 = vmul.f32 %v719, 1.442695
          %v723 = vpow.pop %v722
          %v724 = vmul.f32 %v716, %v721
          %v725 = vmul.f32 %v717, %v723
          %v726 = vsub.f32 %v710, %v714
          %v727 = vsub.f32 %v711, %v715
          %v728 = vmul.f32 %v726, 1.442695
          %v729 = vpow.pop %v728
          %v730 = vmul.f32 %v727, 1.442695
          %v731 = vpow.pop %v730
          %v732 = vadd.f32 %v724, %v729
          %v733 = vadd.f32 %v725, %v731
          %v734 = vlog2.pop %v732
          %v735 = vmul.f32 %v734, 0.6931472
          %v736 = vlog2.pop %v733
          %v737 = vmul.f32 %v736, 0.6931472
          %v738 = vadd.f32 %v714, %v735
          %v739 = vadd.f32 %v715, %v737
          %v740 = vsub.f32 %v738, %v710
          %v741 = vsub.f32 %v739, %v711
          %742 = vst.msk [vmem:[%s441] sm:$0xff] %vm628, %v740
          %743 = vst.msk [vmem:[%s441 + $0x8] sm:$0xff] %vm628, %v741
          %744 = vst.msk [vmem:[%s435] sm:$0xff] %vm628, %v700
          %745 = vst.msk [vmem:[%s435 + $0x8] sm:$0xff] %vm628, %v701
        $region81: #{label_circle_loss_forward.1} parent=68 // pred_fallthru
          _
        %s746 = sand.u32 %s117, 1
        %s747 = sand.u32 %s117, 1
        %s748 = smul.addr %s747, 8
        %s749 = scalar_lea.vmem [#allocation6], %s748
        %s750 = smul.u32 2, %s21
        %p751 = scmp.lt.s32.totalorder %s750, 5
        %s752 = scalar_select %p751, %s750, 5
        %s753 = smul.addr %s752, 8
        %s754 = scalar_lea.vmem %s4, %s753
        %s755 = smul.u32 2, %s21
        %p756 = scmp.lt.s32.totalorder %s755, 5
        %s757 = scalar_select %p756, %s755, 5
        %s758 = smul.addr %s757, 8
        %s759 = scalar_lea.vmem %s5, %s758
        // Predicated region
        $region82: #{label_circle_loss_forward.1} parent=68 // pred_check
          %p760 = pneg %p127
        $region83: #{label_circle_loss_forward.1} parent=68 // pred_check_branch
          %762 = sbr.rel (%p760) target = $region85
        $region84: #{label_circle_loss_forward.1} parent=68 // pred_region
          %s763 = smul.u32 2, %s21
          %s764 = smul.addr %s763, 3
          %s765 = sadd.s32 %s22, %s764
          %s766 = smul.addr %s765, 4
          %s767 = scalar_lea.vmem %s3, %s766
          // Predicated region
          $region86: #{label_circle_loss_forward.1} parent=84 // pred_check
            _
          $region87: #{label_circle_loss_forward.1} parent=84 // pred_check_branch
            %769 = sbr.rel (0) target = $region89
          $region88: #{label_circle_loss_forward.1} parent=84 // pred_region
            // Predicated region
            $region90: #{label_circle_loss_forward.1} parent=88 // pred_check
              _
            $region91: #{label_circle_loss_forward.1} parent=88 // pred_check_branch
              %771 = sbr.rel target = $region93
            $region92: #{label_circle_loss_forward.1} parent=88 // pred_region
              // Predicated region
              $region105: #{label_circle_loss_forward.1} parent=92 // pred_check
                _
              $region106: #{label_circle_loss_forward.1} parent=92 // pred_check_branch
                %789 = sbr.rel (0) target = $region108
              $region107: #{label_circle_loss_forward.1} parent=92 // pred_region
                loop: start=0, step=1, limit=1
                $region109: #{label_circle_loss_forward.1} parent=107 // loop_pre_header
                  _
                $region110: #{label_circle_loss_forward.1} parent=107 // loop_header
                  %s791 = sphi 0, %s795
                  %p792 = scmp.ge.s32.totalorder %s791, 1
                  %s796 = sphi %s749, %s749
                  %s797 = sphi %s767, %s767
                $region111: #{label_circle_loss_forward.1} parent=107 // loop_header_branch
                  %794 = sbr.rel (%p792) target = $region115
                $region112: #{label_circle_loss_forward.1} parent=107 // loop_body
                  _
                $region113: #{label_circle_loss_forward.1} parent=107 // loop_footer
                  %s795 = sadd.s32 1, %s791
                $region114: #{label_circle_loss_forward.1} parent=107 // loop_footer_branch
                  %790 = sbr.rel target = $region110
                $region115: #{label_circle_loss_forward.1} parent=107 // loop_exit
                  _
                %s799 = ssub.s32 16, 1
                loop: start=0, step=1, limit=1
                $region116: #{label_circle_loss_forward.1} parent=107 // loop_pre_header
                  _
                $region117: #{label_circle_loss_forward.1} parent=107 // loop_header
                  %s801 = sphi 0, %s805
                  %p802 = scmp.ge.s32.totalorder %s801, 1
                  %s806 = sphi %s749, %s749
                  %s807 = sphi %s767, %s767
                $region118: #{label_circle_loss_forward.1} parent=107 // loop_header_branch
                  %804 = sbr.rel (%p802) target = $region122
                $region119: #{label_circle_loss_forward.1} parent=107 // loop_body
                  %v808 = vld [vmem:[%s806] sm:%s799]
                  %809 = vst [vmem:[%s807] sm:%s799] %v808
                  %v810 = vld [vmem:[%s806 + $0x4] sm:%s799]
                  %811 = vst [vmem:[%s807 + $0xc] sm:%s799] %v810
                $region120: #{label_circle_loss_forward.1} parent=107 // loop_footer
                  %s805 = sadd.s32 1, %s801
                $region121: #{label_circle_loss_forward.1} parent=107 // loop_footer_branch
                  %800 = sbr.rel target = $region117
                $region122: #{label_circle_loss_forward.1} parent=107 // loop_exit
                  _
              $region108: #{label_circle_loss_forward.1} parent=92 // pred_fallthru
                _
            $region93: #{label_circle_loss_forward.1} parent=88 // pred_fallthru
              _
            // Predicated region
            $region94: #{label_circle_loss_forward.1} parent=88 // pred_check
              _
            $region95: #{label_circle_loss_forward.1} parent=88 // pred_check_branch
              %773 = sbr.rel (0) target = $region97
            $region96: #{label_circle_loss_forward.1} parent=88 // pred_region
              %s775 = ssub.s32 16, 1
              loop: start=0, step=1, limit=1
              $region98: #{label_circle_loss_forward.1} parent=96 // loop_pre_header
                _
              $region99: #{label_circle_loss_forward.1} parent=96 // loop_header
                %s777 = sphi 0, %s781
                %p778 = scmp.ge.s32.totalorder %s777, 1
                %s782 = sphi %s749, %s749
                %s783 = sphi %s767, %s767
              $region100: #{label_circle_loss_forward.1} parent=96 // loop_header_branch
                %780 = sbr.rel (%p778) target = $region104
              $region101: #{label_circle_loss_forward.1} parent=96 // loop_body
                %v784 = vld [vmem:[%s782] sm:%s775]
                %785 = vst [vmem:[%s783] sm:%s775] %v784
                %v786 = vld [vmem:[%s782 + $0x4] sm:%s775]
                %787 = vst [vmem:[%s783 + $0xc] sm:%s775] %v786
              $region102: #{label_circle_loss_forward.1} parent=96 // loop_footer
                %s781 = sadd.s32 1, %s777
              $region103: #{label_circle_loss_forward.1} parent=96 // loop_footer_branch
                %776 = sbr.rel target = $region99
              $region104: #{label_circle_loss_forward.1} parent=96 // loop_exit
                _
            $region97: #{label_circle_loss_forward.1} parent=88 // pred_fallthru
              _
          $region89: #{label_circle_loss_forward.1} parent=84 // pred_fallthru
            _
          %812 = vnop
        $region85: #{label_circle_loss_forward.1} parent=68 // pred_fallthru
          _
        // Predicated region
        $region123: #{label_circle_loss_forward.1} parent=68 // pred_check
          %p813 = pneg %p153
        $region124: #{label_circle_loss_forward.1} parent=68 // pred_check_branch
          %815 = sbr.rel (%p813) target = $region126
        $region125: #{label_circle_loss_forward.1} parent=68 // pred_region
          %s816 = smul.u32 2, %s21
        $region126: #{label_circle_loss_forward.1} parent=68 // pred_fallthru
          _
        // Predicated region
        $region127: #{label_circle_loss_forward.1} parent=68 // pred_check
          %p817 = pneg %p179
        $region128: #{label_circle_loss_forward.1} parent=68 // pred_check_branch
          %819 = sbr.rel (%p817) target = $region130
        $region129: #{label_circle_loss_forward.1} parent=68 // pred_region
          %s820 = smul.u32 2, %s21
        $region130: #{label_circle_loss_forward.1} parent=68 // pred_fallthru
          _
      $region69: #{label_circle_loss_forward.1} parent=5 // pred_fallthru
        _
      %p821 = scmp.le.s32.totalorder 2, %s12
      // Predicated region
      $region131: #{label_circle_loss_forward.1} parent=5 // pred_check
        %p822 = pneg %p821
      $region132: #{label_circle_loss_forward.1} parent=5 // pred_check_branch
        %824 = sbr.rel (%p822) target = $region134
      $region133: #{label_circle_loss_forward.1} parent=5 // pred_region
        %s825 = ssub.s32 %s12, 2
        // Predicated region
        $region135: #{label_circle_loss_forward.1} parent=133 // pred_check
          %p826 = pneg %p133
        $region136: #{label_circle_loss_forward.1} parent=133 // pred_check_branch
          %828 = sbr.rel (%p826) target = $region138
        $region137: #{label_circle_loss_forward.1} parent=133 // pred_region
          %s829 = sand.u32 %s118, 1
          %s830 = sand.u32 %s118, 1
          %s831 = smul.addr %s830, 8
          %s832 = scalar_lea.vmem [#allocation6], %s831
        $region138: #{label_circle_loss_forward.1} parent=133 // pred_fallthru
          _
        // Predicated region
        $region139: #{label_circle_loss_forward.1} parent=133 // pred_check
          %p833 = pneg %p159
        $region140: #{label_circle_loss_forward.1} parent=133 // pred_check_branch
          %835 = sbr.rel (%p833) target = $region142
        $region141: #{label_circle_loss_forward.1} parent=133 // pred_region
          %s836 = smul.u32 2, %s23
          %p837 = scmp.lt.s32.totalorder %s836, 5
          %s838 = scalar_select %p837, %s836, 5
          %s839 = smul.addr %s838, 8
          %s840 = scalar_lea.vmem %s4, %s839
        $region142: #{label_circle_loss_forward.1} parent=133 // pred_fallthru
          _
        // Predicated region
        $region143: #{label_circle_loss_forward.1} parent=133 // pred_check
          %p841 = pneg %p185
        $region144: #{label_circle_loss_forward.1} parent=133 // pred_check_branch
          %843 = sbr.rel (%p841) target = $region146
        $region145: #{label_circle_loss_forward.1} parent=133 // pred_region
          %s844 = smul.u32 2, %s23
          %p845 = scmp.lt.s32.totalorder %s844, 5
          %s846 = scalar_select %p845, %s844, 5
          %s847 = smul.addr %s846, 8
          %s848 = scalar_lea.vmem %s5, %s847
        $region146: #{label_circle_loss_forward.1} parent=133 // pred_fallthru
          _
      $region134: #{label_circle_loss_forward.1} parent=5 // pred_fallthru
        _
    $region6: #{label_circle_loss_forward.1} parent=1 // loop_footer
      %s16 = sadd.s32 1, %s12
    $region7: #{label_circle_loss_forward.1} parent=1 // loop_footer_branch
      %11 = sbr.rel target = $region3
    $region8: #{label_circle_loss_forward.1} parent=1 // loop_exit
      _

</llo_original>
